<compile_context>
chip_gen: v6e
topology: v6e:2x2x1
jax: 0.10.0
libtpu: 0.0.40
codegen_flags: <defaults>
</compile_context>

<pallas_src>
import functools

import jax
import jax.numpy as jnp
from jax import lax
from jax.experimental import pallas as pl
from jax.experimental.pallas import tpu as pltpu


def _round_up(v, m):
    return (v + m - 1) // m * m


def linear_kernel(x_ref, m_ref, b_ref, y_ref):
    """One (i, j, k) grid step of y = x @ m.T + b.

    x_ref: (tm, tk)  rows block i, contraction block k
    m_ref: (tn, tk)  weight in native (d_out, d_in) layout, block (j, k)
    b_ref: (1,  tn)  bias block j
    y_ref: (tm, tn)  f32; same block index for all k -> acts as accumulator.
    """
    k = pl.program_id(2)

    @pl.when(k == 0)
    def _():
        y_ref[...] = jnp.zeros_like(y_ref)

    # Transposed contraction on the MXU (== x @ m.T): contract the last dim
    # of both operands, so the weight never needs an HBM-side transpose.
    y_ref[...] += lax.dot_general(
        x_ref[...],
        m_ref[...],
        dimension_numbers=(((1,), (1,)), ((), ())),
        preferred_element_type=jnp.float32,
    )

    @pl.when(k == pl.num_programs(2) - 1)
    def _():
        # Bias added exactly once, in the finalize branch.
        y_ref[...] += b_ref[...]


@functools.partial(jax.jit, static_argnames=("tm", "tn", "tk"))
def linear_layer(x, m, b, *, tm=512, tn=512, tk=1024):
    """y = x @ m.T + b  (PyTorch nn-style weight m of shape (d_out, d_in))."""
    N, d_in = x.shape
    d_out, d_in2 = m.shape
    assert d_in == d_in2, (x.shape, m.shape)

    # Clamp tiles to the alignment-padded problem size (f32: 8-sublane rows,
    # 128-lane columns).
    tm = min(tm, _round_up(N, 8))
    tk = min(tk, _round_up(d_in, 128))
    tn = min(tn, _round_up(d_out, 128))

    Mp = _round_up(N, tm)
    Np = _round_up(d_out, tn)
    Kp = _round_up(d_in, tk)

    # Megacore (v7x has 2 TensorCores): if the "parallel" part of the grid
    # collapsed to a single block, halve a tile (keeping alignment) so both
    # cores get work.
    if (Mp // tm) * (Np // tn) < 2:
        if tn >= 256 and tn % 256 == 0:
            tn //= 2
        elif tm >= 16 and tm % 16 == 0:
            tm //= 2
        Mp = _round_up(N, tm)
        Np = _round_up(d_out, tn)

    # Zero-padding; under jit these are elided when shapes are already
    # aligned. Padded rows/cols contribute 0 to the dot and are sliced away.
    x_p = x if (Mp == N and Kp == d_in) else jnp.pad(
        x, ((0, Mp - N), (0, Kp - d_in)))
    m_p = m if (Np == d_out and Kp == d_in) else jnp.pad(
        m, ((0, Np - d_out), (0, Kp - d_in)))
    b_p = b.reshape(1, d_out)
    if Np != d_out:
        b_p = jnp.pad(b_p, ((0, 0), (0, Np - d_out)))

    grid = (Mp // tm, Np // tn, Kp // tk)

    cost = pl.CostEstimate(
        flops=2 * Mp * Np * Kp,
        transcendentals=0,
        bytes_accessed=(Mp * Kp + Np * Kp + Mp * Np + Np) * 4,
    )

    # Double-buffered f32 tile footprint; cap at 48 MiB (safe on v7x's
    # 64 MiB/TC, well within v5e/v6e's 128 MiB).
    tile_bytes = 2 * (tm * tk + tn * tk + tm * tn + tn) * 4
    vmem_limit = min(max(2 * tile_bytes, 16 * 1024 * 1024), 48 * 1024 * 1024)

    out = pl.pallas_call(
        linear_kernel,
        out_shape=jax.ShapeDtypeStruct((Mp, Np), jnp.float32),
        grid_spec=pltpu.PrefetchScalarGridSpec(
            num_scalar_prefetch=0,
            grid=grid,
            in_specs=[
                pl.BlockSpec((tm, tk), lambda i, j, k: (i, k)),  # x tile
                pl.BlockSpec((tn, tk), lambda i, j, k: (j, k)),  # m tile (native layout)
                pl.BlockSpec((1, tn), lambda i, j, k: (0, j)),   # bias tile
            ],
            out_specs=pl.BlockSpec((tm, tn), lambda i, j, k: (i, j)),
        ),
        compiler_params=pltpu.CompilerParams(
            dimension_semantics=("parallel", "parallel", "arbitrary"),
            vmem_limit_bytes=vmem_limit,
        ),
        cost_estimate=cost,
    )(x_p, m_p, b_p)

    if Mp != N or Np != d_out:
        out = out[:N, :d_out]
    return out


if __name__ == "__main__":
    key = jax.random.PRNGKey(0)
    kx, km, kb = jax.random.split(key, 3)

    N, d_in, d_out = 8, 32, 16
    x = jax.random.normal(kx, (N, d_in), dtype=jnp.float32)
    m = jax.random.normal(km, (d_out, d_in), dtype=jnp.float32)  # randn(out, in)
    b = jax.random.normal(kb, (d_out,), dtype=jnp.float32)       # randn(out)

    y = linear_layer(x, m, b)
    jax.block_until_ready(y)

    y_ref = x @ m.T + b[None, :]
    assert y.shape == (N, d_out)
    assert jnp.allclose(y, y_ref, atol=1e-5, rtol=1e-5)
    print("KERNEL_OK")
</pallas_src>

<mosaic_0001>
module attributes {stable_mosaic.version = 11 : i64} {
  func.func @linear_kernel(%arg0: i32, %arg1: i32, %arg2: i32, %arg3: memref<8x128xf32, #tpu.memory_space<vmem>>, %arg4: memref<128x128xf32, #tpu.memory_space<vmem>>, %arg5: memref<1x128xf32, #tpu.memory_space<vmem>>, %arg6: memref<8x128xf32, #tpu.memory_space<vmem>>) attributes {dimension_semantics = [#tpu.dimension_semantics<parallel>, #tpu.dimension_semantics<parallel>, #tpu.dimension_semantics<arbitrary>], iteration_bounds = array<i64: 1, 1, 1>, scalar_prefetch = 0 : i64, scratch_operands = 0 : i64, tpu.core_type = #tpu.core_type<tc>, window_params = [{transform_indices = @transform_0, window_bounds = array<i64: 8, 128>}, {transform_indices = @transform_1, window_bounds = array<i64: 128, 128>}, {transform_indices = @transform_2, window_bounds = array<i64: 1, 128>}, {transform_indices = @transform_3, window_bounds = array<i64: 8, 128>}]} {
    %c0_i32 = arith.constant 0 : i32
    %0 = arith.cmpi eq, %arg2, %c0_i32 : i32
    %1 = arith.extui %0 : i1 to i32
    %c0_i32_0 = arith.constant 0 : i32
    %2 = arith.cmpi ne, %1, %c0_i32_0 : i32
    scf.if %2 {
      %cst_10 = arith.constant 0.000000e+00 : f32
      %12 = vector.broadcast %cst_10 : f32 to vector<8x128xf32>
      %c0_11 = arith.constant 0 : index
      %c0_12 = arith.constant 0 : index
      %13 = vector.load %arg6[%c0_11, %c0_12] : memref<8x128xf32, #tpu.memory_space<vmem>>, vector<8x128xf32>
      tpu.vector_store %arg6[%c0_11, %c0_12], %12 {strides = array<i32>} : memref<8x128xf32, #tpu.memory_space<vmem>>, vector<8x128xf32>,
    } else {
    }
    %c0 = arith.constant 0 : index
    %c0_1 = arith.constant 0 : index
    %3 = vector.load %arg6[%c0, %c0_1] : memref<8x128xf32, #tpu.memory_space<vmem>>, vector<8x128xf32>
    %c0_2 = arith.constant 0 : index
    %c0_3 = arith.constant 0 : index
    %4 = vector.load %arg3[%c0_2, %c0_3] : memref<8x128xf32, #tpu.memory_space<vmem>>, vector<8x128xf32>
    %c0_4 = arith.constant 0 : index
    %c0_5 = arith.constant 0 : index
    %5 = vector.load %arg4[%c0_4, %c0_5] : memref<128x128xf32, #tpu.memory_space<vmem>>, vector<128x128xf32>
    %cst = arith.constant dense<0.000000e+00> : vector<8x128xf32>
    %6 = tpu.matmul %4, %5, %cst {dimension_numbers = #tpu.dot_dimension_numbers<[1], [1], [0], [0], [0, 0, 1, 0], [], []>} : vector<8x128xf32>, vector<128x128xf32>, vector<8x128xf32> -> vector<8x128xf32>
    %7 = arith.addf %3, %6 : vector<8x128xf32>
    %c0_6 = arith.constant 0 : index
    %c0_7 = arith.constant 0 : index
    %8 = vector.load %arg6[%c0_6, %c0_7] : memref<8x128xf32, #tpu.memory_space<vmem>>, vector<8x128xf32>
    tpu.vector_store %arg6[%c0_6, %c0_7], %7 {strides = array<i32>} : memref<8x128xf32, #tpu.memory_space<vmem>>, vector<8x128xf32>,
    %c0_i32_8 = arith.constant 0 : i32
    %9 = arith.cmpi eq, %arg2, %c0_i32_8 : i32
    %10 = arith.extui %9 : i1 to i32
    %c0_i32_9 = arith.constant 0 : i32
    %11 = arith.cmpi ne, %10, %c0_i32_9 : i32
    scf.if %11 {
      %c0_10 = arith.constant 0 : index
      %c0_11 = arith.constant 0 : index
      %12 = vector.load %arg6[%c0_10, %c0_11] : memref<8x128xf32, #tpu.memory_space<vmem>>, vector<8x128xf32>
      %c0_12 = arith.constant 0 : index
      %c0_13 = arith.constant 0 : index
      %13 = vector.load %arg5[%c0_12, %c0_13] : memref<1x128xf32, #tpu.memory_space<vmem>>, vector<1x128xf32>
      %14 = vector.broadcast %13 : vector<1x128xf32> to vector<8x128xf32>
      %15 = arith.addf %12, %14 : vector<8x128xf32>
      %c0_14 = arith.constant 0 : index
      %c0_15 = arith.constant 0 : index
      %16 = vector.load %arg6[%c0_14, %c0_15] : memref<8x128xf32, #tpu.memory_space<vmem>>, vector<8x128xf32>
      tpu.vector_store %arg6[%c0_14, %c0_15], %15 {strides = array<i32>} : memref<8x128xf32, #tpu.memory_space<vmem>>, vector<8x128xf32>,
    } else {
    }
    return
  }
  func.func @transform_0(%arg0: i32, %arg1: i32, %arg2: i32) -> (i32, i32) {
    %c0_i32 = arith.constant 0 : i32
    return %arg0, %arg2 : i32, i32
  }
  func.func @transform_1(%arg0: i32, %arg1: i32, %arg2: i32) -> (i32, i32) {
    %c0_i32 = arith.constant 0 : i32
    return %arg1, %arg2 : i32, i32
  }
  func.func @transform_2(%arg0: i32, %arg1: i32, %arg2: i32) -> (i32, i32) {
    %c0_i32 = arith.constant 0 : i32
    %c0_i32_0 = arith.constant 0 : i32
    return %c0_i32, %arg1 : i32, i32
  }
  func.func @transform_3(%arg0: i32, %arg1: i32, %arg2: i32) -> (i32, i32) {
    %c0_i32 = arith.constant 0 : i32
    return %arg0, %arg1 : i32, i32
  }
}

</mosaic_0001>

<llo_original>
// kernel: linear_layer.1
$region0: #{linear_layer.1}
  #allocation0 [shape = 'u32[]', space=smem, size = 0x4, offset = 0x4, fixed_abs, tag = 'smem constant byte address 0x4 - core index']
  #allocation1 [shape = 'u32[144,128]{1,0:T(1,128)}', space=vmem, size = 0x12000, scoped, tag = 'internal scratch']
  %s0 = inlined_call_operand.vmem [shape: f32[8,128], index: 0, kind: input, shape index: {}]
  %s1 = inlined_call_operand.vmem [shape: f32[128,128], index: 1, kind: input, shape index: {}]
  %s2 = inlined_call_operand.vmem [shape: f32[1,128], index: 2, kind: input, shape index: {}]
  %s3 = inlined_call_operand.hbm [shape: f32[8,128], index: 3, kind: output, shape index: {}]
  %s4 = sld [smem:[#allocation0]]
  $region30: #{linear_layer.1} parent=0
    _
  %s6 = ssub.s32 1, %s4
  %s7 = scalar_select 0, %s6, %s4
  $region1: #{linear_layer.1} parent=0
    #allocation2 [shape = 'u8[4096]{0}', space=vmem, size = 0x1000, scoped, tag = 'output window, operand 0, single buffered']
    #allocation3 [shape = 's32[1]{0}', space=sflag, size = 0x4, scoped, tag = 'scoped memory for linear_layer.1']
    %8 = vsyncpa [#allocation3], 0
    // Predicated region
    $region2: #{linear_layer.1} parent=1 // pred_check
      _
    $region3: #{linear_layer.1} parent=1 // pred_check_branch
      %10 = sbr.rel (0) target = $region5
    $region4: #{linear_layer.1} parent=1 // pred_region
      _
    $region5: #{linear_layer.1} parent=1 // pred_fallthru
      _
    // Predicated region
    $region6: #{linear_layer.1} parent=1 // pred_check
      _
    $region7: #{linear_layer.1} parent=1 // pred_check_branch
      %12 = sbr.rel (0) target = $region9
    $region8: #{linear_layer.1} parent=1 // pred_region
      _
    $region9: #{linear_layer.1} parent=1 // pred_fallthru
      _
    // Predicated region
    $region10: #{linear_layer.1} parent=1 // pred_check
      _
    $region11: #{linear_layer.1} parent=1 // pred_check_branch
      %14 = sbr.rel (0) target = $region13
    $region12: #{linear_layer.1} parent=1 // pred_region
      _
    $region13: #{linear_layer.1} parent=1 // pred_fallthru
      _
    %p15 = scmp.eq.s32.totalorder 0, 0
    // Predicated region
    $region14: #{linear_layer.1} parent=1 // pred_check
      %p16 = pneg %p15
    $region15: #{linear_layer.1} parent=1 // pred_check_branch
      %18 = sbr.rel (%p16) target = $region17
    $region16: #{linear_layer.1} parent=1 // pred_region
      %19 = vst [vmem:[#allocation2] sm:$0xff] 0.0
    $region17: #{linear_layer.1} parent=1 // pred_fallthru
      _
    %v20 = vld [vmem:[#allocation2] sm:$0xff]
    %v21 = vld [vmem:[%s0] sm:$0xff]
    %v22 = vld [vmem:[%s1] sm:$0xff]
    %v23 = vld [vmem:[%s1 + $0x8] sm:$0xff]
    %v24 = vld [vmem:[%s1 + $0x10] sm:$0xff]
    %v25 = vld [vmem:[%s1 + $0x18] sm:$0xff]
    %v26 = vld [vmem:[%s1 + $0x20] sm:$0xff]
    %v27 = vld [vmem:[%s1 + $0x28] sm:$0xff]
    %v28 = vld [vmem:[%s1 + $0x30] sm:$0xff]
    %v29 = vld [vmem:[%s1 + $0x38] sm:$0xff]
    %v30 = vld [vmem:[%s1 + $0x40] sm:$0xff]
    %v31 = vld [vmem:[%s1 + $0x48] sm:$0xff]
    %v32 = vld [vmem:[%s1 + $0x50] sm:$0xff]
    %v33 = vld [vmem:[%s1 + $0x58] sm:$0xff]
    %v34 = vld [vmem:[%s1 + $0x60] sm:$0xff]
    %v35 = vld [vmem:[%s1 + $0x68] sm:$0xff]
    %v36 = vld [vmem:[%s1 + $0x70] sm:$0xff]
    %v37 = vld [vmem:[%s1 + $0x78] sm:$0xff]
    %38 = vmatprep.subr.mxu0 0.0
    %39 = vmatpush1.xpose.msra.mxu0 %v37
    %40 = vmatprep.subr.mxu0 0.0
    %41 = vmatpush1.xpose.msra.mxu0 %v36
    %42 = vmatprep.subr.mxu0 0.0
    %43 = vmatpush1.xpose.msra.mxu0 %v35
    %44 = vmatprep.subr.mxu0 0.0
    %45 = vmatpush1.xpose.msra.mxu0 %v34
    %46 = vmatprep.subr.mxu0 0.0
    %47 = vmatpush1.xpose.msra.mxu0 %v33
    %48 = vmatprep.subr.mxu0 0.0
    %49 = vmatpush1.xpose.msra.mxu0 %v32
    %50 = vmatprep.subr.mxu0 0.0
    %51 = vmatpush1.xpose.msra.mxu0 %v31
    %52 = vmatprep.subr.mxu0 0.0
    %53 = vmatpush1.xpose.msra.mxu0 %v30
    %54 = vmatprep.subr.mxu0 0.0
    %55 = vmatpush1.xpose.msra.mxu0 %v29
    %56 = vmatprep.subr.mxu0 0.0
    %57 = vmatpush1.xpose.msra.mxu0 %v28
    %58 = vmatprep.subr.mxu0 0.0
    %59 = vmatpush1.xpose.msra.mxu0 %v27
    %60 = vmatprep.subr.mxu0 0.0
    %61 = vmatpush1.xpose.msra.mxu0 %v26
    %62 = vmatprep.subr.mxu0 0.0
    %63 = vmatpush1.xpose.msra.mxu0 %v25
    %64 = vmatprep.subr.mxu0 0.0
    %65 = vmatpush1.xpose.msra.mxu0 %v24
    %66 = vmatprep.subr.mxu0 0.0
    %67 = vmatpush1.xpose.msra.mxu0 %v23
    %68 = vmatprep.subr.mxu0 0.0
    %69 = vmatpush1.xpose.msra.mxu0 %v22
    %70 = vmatprep.subr.mxu0 0.0
    %71 = vmatpush2.xpose.msra.mxu0 0.0
    %72 = vmatprep.subr.mxu0 0.0
    %73 = vmatpush2.xpose.msra.mxu0 0.0
    %74 = vmatprep.subr.mxu0 0.0
    %75 = vmatpush2.xpose.msra.mxu0 0.0
    %76 = vmatprep.subr.mxu0 0.0
    %77 = vmatpush2.xpose.msra.mxu0 0.0
    %78 = vmatprep.subr.mxu0 0.0
    %79 = vmatpush2.xpose.msra.mxu0 0.0
    %80 = vmatprep.subr.mxu0 0.0
    %81 = vmatpush2.xpose.msra.mxu0 0.0
    %82 = vmatprep.subr.mxu0 0.0
    %83 = vmatpush2.xpose.msra.mxu0 0.0
    %84 = vmatprep.subr.mxu0 0.0
    %85 = vmatpush2.xpose.msra.mxu0 0.0
    %86 = vmatprep.subr.mxu0 0.0
    %87 = vmatpush2.xpose.msra.mxu0 0.0
    %88 = vmatprep.subr.mxu0 0.0
    %89 = vmatpush2.xpose.msra.mxu0 0.0
    %90 = vmatprep.subr.mxu0 0.0
    %91 = vmatpush2.xpose.msra.mxu0 0.0
    %92 = vmatprep.subr.mxu0 0.0
    %93 = vmatpush2.xpose.msra.mxu0 0.0
    %94 = vmatprep.subr.mxu0 0.0
    %95 = vmatpush2.xpose.msra.mxu0 0.0
    %96 = vmatprep.subr.mxu0 0.0
    %97 = vmatpush2.xpose.msra.mxu0 0.0
    %98 = vmatprep.subr.mxu0 0.0
    %99 = vmatpush2.xpose.msra.mxu0 0.0
    %100 = vmatprep.subr.mxu0 0.0
    %101 = vmatpush2.xpose.msra.mxu0 0.0
    %102 = vmatprep.mubr.f32.mxu0 0.0
    %103 = vmatmul.mubr.f32.gmra.mxu0 %v21
    %v104 = vpop.f32.mrf.mxu0
    %v105 = vadd.f32 0.0, %v104
    %v106 = vpop.f32.mrf.mxu0
    %107 = vdwg.mxu0
    %v108 = vadd.f32 %v20, %v105
    %109 = vst [vmem:[#allocation2] sm:$0xff] %v108
    // Predicated region
    $region18: #{linear_layer.1} parent=1 // pred_check
      %p110 = pneg %p15
    $region19: #{linear_layer.1} parent=1 // pred_check_branch
      %112 = sbr.rel (%p110) target = $region21
    $region20: #{linear_layer.1} parent=1 // pred_region
      %v113 = vld [vmem:[#allocation2] sm:$0xff]
      %v114 = vld [vmem:[%s2] sm:$0x1]
      %v116 = vlaneseq
      %v117 = vshrl.u32 %v116, 7
      %v118 = vsub.s32 0, %v117
      %v119 = vrot.slane %v114, %v118
      %v121 = vadd.f32 %v113, %v119
      %122 = vst [vmem:[#allocation2] sm:$0xff] %v121
    $region21: #{linear_layer.1} parent=1 // pred_fallthru
      _
    // Predicated region
    $region22: #{linear_layer.1} parent=1 // pred_check
      _
    $region23: #{linear_layer.1} parent=1 // pred_check_branch
      %124 = sbr.rel (0) target = $region25
    $region24: #{linear_layer.1} parent=1 // pred_region
      %s126 = ssub.s32 128, 128
      %127 = vsyncadd [#allocation3], %s126
      %s129 = sshll.u32 [#allocation2], 4
      %s130 = int_to_ptr.vmem [resolvable:$true] %s129
      %132 = dma.vmem_to_hbm [thread:$0]  %s130, 128, %s3, [#allocation3]
    $region25: #{linear_layer.1} parent=1 // pred_fallthru
      _
    // Predicated region
    $region26: #{linear_layer.1} parent=1 // pred_check
      _
    $region27: #{linear_layer.1} parent=1 // pred_check_branch
      %134 = sbr.rel (0) target = $region29
    $region28: #{linear_layer.1} parent=1 // pred_region
      %135 = dma.done [#allocation3], 128
    $region29: #{linear_layer.1} parent=1 // pred_fallthru
      _
    %136 = vsyncpa [#allocation3], 1

</llo_original>
